<compile_context>
chip_gen: v7x
topology: tpu7x:2x2x1
jax: 0.10.0
libtpu: 0.0.40
codegen_flags: <defaults>
</compile_context>

<pallas_src>
import functools
import math

import jax
import jax.numpy as jnp
from jax.experimental import pallas as pl
from jax.experimental.pallas import tpu as pltpu


def _tensor_fusion_kernel(l_tile, d_last_pad, s_ref, m_ref, w_ref, b_ref,
                          o_ref):
    """One (n_tile, K_tile) @ (K_tile, bs) MXU step, K_tile = l_tile * d_last_pad.

    s_ref: (l_tile, bs)        chunk of the lead-modality scale table (S.T)
    m_ref: (d_last_pad, bs)    last modality, transposed + padded (resident)
    w_ref: (n_tile, K_tile)    pre-blocked bf16 Linear-weight chunk
    b_ref: (n_tile, 1)         bias column
    o_ref: (n_tile, bs) f32    transposed output tile (doubles as accumulator)
    """
    ki = pl.program_id(1)

    # Initialize the resident output block with the bias (no extra scratch,
    # no epilogue copy).
    @pl.when(ki == 0)
    def _():
        o_ref[...] = jnp.broadcast_to(b_ref[...], o_ref.shape)

    # Flattened outer-product chunk, transposed to (K_tile, bs):
    #   lhs_t[l * d_last_pad + j, b] = scale[b, l] * m_last[b, j]
    # d_last_pad % 8 == 0, so the leading-dim collapse is a cheap sublane
    # regroup (no lane relayout). Cast to bf16 to match the bf16 W stream;
    # accumulation stays f32.
    lhs3 = s_ref[...][:, None, :] * m_ref[...][None, :, :]      # (l_tile, d_last_pad, bs)
    lhs_t = lhs3.reshape(l_tile * d_last_pad,
                         lhs3.shape[-1]).astype(jnp.bfloat16)   # (K_tile, bs)

    # MXU hot path: full-depth contraction over K_tile, f32 accumulate into
    # the f32 output block.
    o_ref[...] += jnp.dot(w_ref[...], lhs_t,
                          preferred_element_type=jnp.float32)


def _round_up(x, m):
    return ((x + m - 1) // m) * m


def _cdiv(a, b):
    return (a + b - 1) // b


def _choose_l_tile(n_lead_prod, d_last_pad, n_tile, itemsize, w_buf_budget):
    """Lead rows per K-chunk: as many as the per-buffer byte budget allows.

    Alignment: when chunked, l_tile is a multiple of 8 (sublanes of the scale
    block) and k_tile = l_tile * d_last_pad is a multiple of 128 (lane-dense
    W chunk). The lead axis is later zero-padded up to grid_k * l_tile, so no
    "full-K" fallback is ever needed and the budget always holds.
    """
    max_lt = max(1, w_buf_budget // (d_last_pad * n_tile * itemsize))
    if n_lead_prod <= max_lt:
        # Single chunk: block extent equals the full (unpadded) lead axis.
        return n_lead_prod
    step = math.lcm(8, 128 // math.gcd(128, d_last_pad))
    return max(step, (max_lt // step) * step)


def tensor_fusion(in_modalities, weight, bias):
    """Pallas implementation of TensorFusion.fusion().

    in_modalities: list of (bs, d_a) f32 arrays (len >= 2)
    weight: (out_dim, prod(d_a)) f32   (nn.Linear weight, PyTorch layout)
    bias:   (out_dim,) f32
    returns: (bs, out_dim) f32
    """
    n = len(in_modalities)
    assert n >= 2, "need at least two modalities"
    bs = int(in_modalities[0].shape[0])
    dims = [int(m.shape[1]) for m in in_modalities]
    d_last = dims[-1]
    out_dim = int(weight.shape[0])
    tensor_size = math.prod(dims)
    assert tuple(weight.shape) == (out_dim, tensor_size)

    # ---- wrapper glue (layout plumbing / tiny precompute only) ----
    # Scale table = flattened outer product of the *lead* modalities,
    # transposed so the lead-product axis is on sublanes, batch on lanes.
    scale = in_modalities[0].astype(jnp.float32)
    for m in in_modalities[1:-1]:
        scale = (scale[:, :, None] *
                 m.astype(jnp.float32)[:, None, :]).reshape(bs, -1)
    n_lead_prod = int(scale.shape[1])

    # Pad the last-modality width to a sublane multiple so the in-kernel
    # reshape stays a free regroup. Padded lanes multiply zero W columns.
    d_last_pad = _round_up(d_last, 8)
    m_last_t = jnp.pad(in_modalities[-1].astype(jnp.float32),
                       ((0, 0), (0, d_last_pad - d_last))).T     # (d_last_pad, bs)

    # Output tiling: n_pad is always a multiple of n_tile (no row truncation).
    n_tile = 128
    grid_n = _cdiv(out_dim, n_tile)
    n_pad = grid_n * n_tile

    # Device-aware W-chunk budget and scoped-VMEM limit.
    try:
        vmem_cap = int(pltpu.get_tpu_info().vmem_capacity_bytes)
    except Exception:  # conservative default (v7x per-core VMEM)
        vmem_cap = 64 << 20
    w_itemsize = 2  # bf16
    w_buf_budget = min(16 << 20, vmem_cap // 6)   # per W buffer (x2 double-buffer)
    vmem_limit = min(vmem_cap * 3 // 4, 100 << 20)

    l_tile = _choose_l_tile(n_lead_prod, d_last_pad, n_tile, w_itemsize,
                            w_buf_budget)
    grid_k = _cdiv(n_lead_prod, l_tile)
    l_pad = grid_k * l_tile
    k_tile = l_tile * d_last_pad

    # Scale table: transposed, zero-padded on the lead axis (padded rows
    # contribute exactly zero to the contraction).
    scale_t = jnp.pad(scale.T, ((0, l_pad - n_lead_prod), (0, 0)))  # (l_pad, bs)

    # Pre-block W (bf16) into (grid_n, grid_k, n_tile, k_tile): each chunk is
    # a single contiguous, lane-dense HBM read.
    w3 = weight.astype(jnp.bfloat16).reshape(out_dim, n_lead_prod, d_last)
    w3 = jnp.pad(w3, ((0, n_pad - out_dim),
                      (0, l_pad - n_lead_prod),
                      (0, d_last_pad - d_last)))
    w_blk = (w3.reshape(grid_n, n_tile, grid_k, l_tile, d_last_pad)
               .transpose(0, 2, 1, 3, 4)
               .reshape(grid_n, grid_k, n_tile, k_tile))

    b_pad = jnp.pad(bias.astype(jnp.float32),
                    (0, n_pad - out_dim)).reshape(n_pad, 1)

    kernel = functools.partial(_tensor_fusion_kernel, l_tile, d_last_pad)

    cost = pl.CostEstimate(
        flops=2 * n_pad * (l_pad * d_last_pad) * bs,
        transcendentals=0,
        bytes_accessed=(int(w_blk.size) * w_itemsize
                        + int(scale_t.size) * 4
                        + int(m_last_t.size) * 4
                        + n_pad * bs * 4 + n_pad * 4),
    )

    out_t = pl.pallas_call(
        kernel,
        out_shape=jax.ShapeDtypeStruct((n_pad, bs), jnp.float32),
        grid=(grid_n, grid_k),
        in_specs=[
            pl.BlockSpec((l_tile, bs), lambda ni, ki: (ki, 0)),       # scale chunk
            pl.BlockSpec((d_last_pad, bs), lambda ni, ki: (0, 0)),    # last modality
            # Pre-blocked W: leading two axes squeezed, chunk is contiguous.
            # TODO(synk): sweep pipeline_mode=pl.Buffered(3) here if a trace
            # shows exposed W DMA (fits under v7x's 64 MiB only for smaller chunks).
            pl.BlockSpec((None, None, n_tile, k_tile),
                         lambda ni, ki: (ni, ki, 0, 0)),
            pl.BlockSpec((n_tile, 1), lambda ni, ki: (ni, 0)),        # bias
        ],
        out_specs=pl.BlockSpec((n_tile, bs), lambda ni, ki: (ni, 0)),
        compiler_params=pltpu.CompilerParams(
            dimension_semantics=("parallel", "arbitrary"),
            vmem_limit_bytes=int(vmem_limit)),
        cost_estimate=cost,
    )(scale_t, m_last_t, w_blk, b_pad)

    return out_t[:out_dim, :].T                                   # (bs, out_dim)


if __name__ == "__main__":
    # Small shapes consistent with the module: 3 modalities.
    in_dimensions = [8, 4, 16]
    out_dimension = 32
    bs = 2
    tensor_size = 1
    for d in in_dimensions:
        tensor_size *= d  # 512

    key = jax.random.PRNGKey(0)
    keys = jax.random.split(key, len(in_dimensions) + 2)
    mods = [jax.random.normal(keys[i], (bs, d), dtype=jnp.float32)
            for i, d in enumerate(in_dimensions)]

    # Deterministic synthetic nn.Linear(tensor_size, out_dimension) params
    # (PyTorch convention: y = x @ W.T + b, W: (out, in)).
    bound = 1.0 / (tensor_size ** 0.5)
    W = jax.random.uniform(keys[-2], (out_dimension, tensor_size),
                           minval=-bound, maxval=bound, dtype=jnp.float32)
    b = jax.random.uniform(keys[-1], (out_dimension,),
                           minval=-bound, maxval=bound, dtype=jnp.float32)

    out = jax.block_until_ready(tensor_fusion(mods, W, b))

    # Pure-JAX references of the PyTorch fusion() semantics.
    tp = mods[0]
    for m in mods[1:]:
        tp = (tp[:, :, None] * m[:, None, :]).reshape(bs, -1)
    # Precision-matched reference: bf16 matmul operands, f32 accumulation
    # (the kernel streams W in bf16).
    ref_bf16 = jnp.dot(tp.astype(jnp.bfloat16),
                       W.astype(jnp.bfloat16).T,
                       preferred_element_type=jnp.float32) + b
    # Loose sanity net against the full-f32 reference.
    ref_f32 = tp @ W.T + b

    assert out.shape == (bs, out_dimension)
    err_bf16 = jnp.max(jnp.abs(out - ref_bf16))
    assert jnp.allclose(out, ref_bf16, atol=2e-3, rtol=2e-3), \
        f"max abs err vs bf16-matched reference: {err_bf16}"
    err_f32 = jnp.max(jnp.abs(out - ref_f32))
    assert jnp.allclose(out, ref_f32, atol=1e-1, rtol=1e-1), \
        f"max abs err vs f32 reference: {err_f32}"
    print("KERNEL_OK")

    # TODO(synk): the module's forward() just prints an error and exits
    # (only fusion()/__call__ has real semantics); nothing to port there.
</pallas_src>

<mosaic_0001>
module attributes {stable_mosaic.version = 11 : i64} {
  func.func @_tensor_fusion_kernel(%arg0: i32, %arg1: i32, %arg2: memref<32x2xf32, #tpu.memory_space<vmem>>, %arg3: memref<16x2xf32, #tpu.memory_space<vmem>>, %arg4: memref<1x1x128x512xbf16, #tpu.memory_space<vmem>>, %arg5: memref<128x1xf32, #tpu.memory_space<vmem>>, %arg6: memref<128x2xf32, #tpu.memory_space<vmem>>) attributes {dimension_semantics = [#tpu.dimension_semantics<parallel>, #tpu.dimension_semantics<arbitrary>], iteration_bounds = array<i64: 1, 1>, scalar_prefetch = 0 : i64, scratch_operands = 0 : i64, tpu.core_type = #tpu.core_type<tc>, window_params = [{transform_indices = @transform_0, window_bounds = array<i64: 32, 2>}, {pipeline_mode = #tpu.pipeline_mode<synchronous>, transform_indices = @transform_1, window_bounds = array<i64: 16, 2>}, {transform_indices = @transform_2, window_bounds = array<i64: 1, 1, 128, 512>}, {transform_indices = @transform_3, window_bounds = array<i64: 128, 1>}, {transform_indices = @transform_4, window_bounds = array<i64: 128, 2>}]} {
    %c0_i32 = arith.constant 0 : i32
    %0 = arith.cmpi eq, %arg1, %c0_i32 : i32
    %1 = arith.extui %0 : i1 to i32
    %c0_i32_0 = arith.constant 0 : i32
    %2 = arith.cmpi ne, %1, %c0_i32_0 : i32
    scf.if %2 {
      %c0_12 = arith.constant 0 : index
      %c0_13 = arith.constant 0 : index
      %18 = vector.load %arg5[%c0_12, %c0_13] : memref<128x1xf32, #tpu.memory_space<vmem>>, vector<128x1xf32>
      %19 = vector.shape_cast %18 : vector<128x1xf32> to vector<128x1xf32>
      %20 = vector.broadcast %19 : vector<128x1xf32> to vector<128x2xf32>
      %c0_14 = arith.constant 0 : index
      %c0_15 = arith.constant 0 : index
      %21 = vector.load %arg6[%c0_14, %c0_15] : memref<128x2xf32, #tpu.memory_space<vmem>>, vector<128x2xf32>
      tpu.vector_store %arg6[%c0_14, %c0_15], %20 {strides = array<i32>} : memref<128x2xf32, #tpu.memory_space<vmem>>, vector<128x2xf32>,
    } else {
    }
    %c0 = arith.constant 0 : index
    %c0_1 = arith.constant 0 : index
    %3 = vector.load %arg2[%c0, %c0_1] : memref<32x2xf32, #tpu.memory_space<vmem>>, vector<32x2xf32>
    %4 = vector.shape_cast %3 : vector<32x2xf32> to vector<32x1x2xf32>
    %c0_2 = arith.constant 0 : index
    %c0_3 = arith.constant 0 : index
    %5 = vector.load %arg3[%c0_2, %c0_3] : memref<16x2xf32, #tpu.memory_space<vmem>>, vector<16x2xf32>
    %6 = vector.shape_cast %5 : vector<16x2xf32> to vector<1x16x2xf32>
    %7 = vector.broadcast %4 : vector<32x1x2xf32> to vector<32x16x2xf32>
    %8 = vector.broadcast %6 : vector<1x16x2xf32> to vector<32x16x2xf32>
    %9 = arith.mulf %7, %8 : vector<32x16x2xf32>
    %10 = vector.shape_cast %9 : vector<32x16x2xf32> to vector<512x2xf32>
    %11 = arith.truncf %10 : vector<512x2xf32> to vector<512x2xbf16>
    %c0_4 = arith.constant 0 : index
    %c0_5 = arith.constant 0 : index
    %12 = vector.load %arg6[%c0_4, %c0_5] : memref<128x2xf32, #tpu.memory_space<vmem>>, vector<128x2xf32>
    %c0_6 = arith.constant 0 : index
    %c0_7 = arith.constant 0 : index
    %c0_8 = arith.constant 0 : index
    %c0_9 = arith.constant 0 : index
    %13 = vector.load %arg4[%c0_6, %c0_7, %c0_8, %c0_9] : memref<1x1x128x512xbf16, #tpu.memory_space<vmem>>, vector<1x1x128x512xbf16>
    %14 = vector.shape_cast %13 : vector<1x1x128x512xbf16> to vector<128x512xbf16>
    %cst = arith.constant dense<0.000000e+00> : vector<128x2xf32>
    %15 = tpu.matmul %14, %11, %cst {dimension_numbers = #tpu.dot_dimension_numbers<[1], [0], [0], [1], [0, 0, 1, 1], [], []>} : vector<128x512xbf16>, vector<512x2xbf16>, vector<128x2xf32> -> vector<128x2xf32>
    %16 = arith.addf %12, %15 : vector<128x2xf32>
    %c0_10 = arith.constant 0 : index
    %c0_11 = arith.constant 0 : index
    %17 = vector.load %arg6[%c0_10, %c0_11] : memref<128x2xf32, #tpu.memory_space<vmem>>, vector<128x2xf32>
    tpu.vector_store %arg6[%c0_10, %c0_11], %16 {strides = array<i32>} : memref<128x2xf32, #tpu.memory_space<vmem>>, vector<128x2xf32>,
    return
  }
  func.func @transform_0(%arg0: i32, %arg1: i32) -> (i32, i32) {
    %c0_i32 = arith.constant 0 : i32
    %c0_i32_0 = arith.constant 0 : i32
    return %arg1, %c0_i32 : i32, i32
  }
  func.func @transform_1(%arg0: i32, %arg1: i32) -> (i32, i32) {
    %c0_i32 = arith.constant 0 : i32
    %c0_i32_0 = arith.constant 0 : i32
    %c0_i32_1 = arith.constant 0 : i32
    return %c0_i32, %c0_i32_0 : i32, i32
  }
  func.func @transform_2(%arg0: i32, %arg1: i32) -> (i32, i32, i32, i32) {
    %c0_i32 = arith.constant 0 : i32
    %c0_i32_0 = arith.constant 0 : i32
    %c0_i32_1 = arith.constant 0 : i32
    return %arg0, %arg1, %c0_i32, %c0_i32_0 : i32, i32, i32, i32
  }
  func.func @transform_3(%arg0: i32, %arg1: i32) -> (i32, i32) {
    %c0_i32 = arith.constant 0 : i32
    %c0_i32_0 = arith.constant 0 : i32
    return %arg0, %c0_i32 : i32, i32
  }
  func.func @transform_4(%arg0: i32, %arg1: i32) -> (i32, i32) {
    %c0_i32 = arith.constant 0 : i32
    %c0_i32_0 = arith.constant 0 : i32
    return %arg0, %c0_i32 : i32, i32
  }
}

</mosaic_0001>

<llo_original>
// kernel: tpu_custom_call.1
$region0: #{tpu_custom_call.1}
  #allocation0 [shape = 'u32[]', space=smem, size = 0x4, offset = 0x4, fixed_abs, tag = 'smem constant byte address 0x4 - core index']
  #allocation1 [shape = 'u32[144,128]{1,0:T(1,128)}', space=vmem, size = 0x12000, scoped, tag = 'internal scratch']
  %s0 = inlined_call_operand.vmem [shape: f32[32,2], index: 0, kind: input, shape index: {}]
  %s1 = inlined_call_operand.vmem [shape: f32[16,2], index: 1, kind: input, shape index: {}]
  %s2 = inlined_call_operand.hbm [shape: bf16[1,1,128,512], index: 2, kind: input, shape index: {}]
  %s3 = inlined_call_operand.vmem [shape: f32[128,1], index: 3, kind: input, shape index: {}]
  %s4 = inlined_call_operand.vmem [shape: f32[128,2], index: 4, kind: output, shape index: {}]
  %s5 = sld [smem:[#allocation0]]
  $region34: #{tpu_custom_call.1} parent=0
    _
  %s7 = ssub.s32 1, %s5
  %s8 = scalar_select 0, %s7, %s5
  $region1: #{tpu_custom_call.1} parent=0
    #allocation2 [shape = 'u8[131072]{0}', space=vmem, size = 0x20000, scoped, tag = 'input window, operand 2, single buffered']
    #allocation3 [shape = 's32[1]{0}', space=sflag, size = 0x4, scoped, tag = 'scoped memory for tpu_custom_call.1']
    %9 = vsyncpa [#allocation3], 0
    // Predicated region
    $region2: #{tpu_custom_call.1} parent=1 // pred_check
      _
    $region3: #{tpu_custom_call.1} parent=1 // pred_check_branch
      %11 = sbr.rel (0) target = $region5
    $region4: #{tpu_custom_call.1} parent=1 // pred_region
      _
    $region5: #{tpu_custom_call.1} parent=1 // pred_fallthru
      _
    // Predicated region
    $region6: #{tpu_custom_call.1} parent=1 // pred_check
      _
    $region7: #{tpu_custom_call.1} parent=1 // pred_check_branch
      %13 = sbr.rel (0) target = $region9
    $region8: #{tpu_custom_call.1} parent=1 // pred_region
      _
    $region9: #{tpu_custom_call.1} parent=1 // pred_fallthru
      _
    // Predicated region
    $region10: #{tpu_custom_call.1} parent=1 // pred_check
      _
    $region11: #{tpu_custom_call.1} parent=1 // pred_check_branch
      %15 = sbr.rel (0) target = $region13
    $region12: #{tpu_custom_call.1} parent=1 // pred_region
      %s17 = ssub.s32 4096, 4096
      %18 = vsyncadd [#allocation3], %s17
      %s19 = sshll.u32 [#allocation2], 4
      %s20 = int_to_ptr.vmem [resolvable:$true] %s19
      %25 = dma.hbm_to_vmem [thread:$0]  %s2, 4096, %s20, [#allocation3], 256, 256, 16
    $region13: #{tpu_custom_call.1} parent=1 // pred_fallthru
      _
    // Predicated region
    $region14: #{tpu_custom_call.1} parent=1 // pred_check
      _
    $region15: #{tpu_custom_call.1} parent=1 // pred_check_branch
      %27 = sbr.rel (0) target = $region17
    $region16: #{tpu_custom_call.1} parent=1 // pred_region
      _
    $region17: #{tpu_custom_call.1} parent=1 // pred_fallthru
      _
    // Predicated region
    $region18: #{tpu_custom_call.1} parent=1 // pred_check
      _
    $region19: #{tpu_custom_call.1} parent=1 // pred_check_branch
      %29 = sbr.rel (0) target = $region21
    $region20: #{tpu_custom_call.1} parent=1 // pred_region
      %30 = dma.done [#allocation3], 4096
    $region21: #{tpu_custom_call.1} parent=1 // pred_fallthru
      _
    %p32 = scmp.eq.s32.totalorder 0, 0
    // Predicated region
    $region22: #{tpu_custom_call.1} parent=1 // pred_check
      %p33 = pneg %p32
    $region23: #{tpu_custom_call.1} parent=1 // pred_check_branch
      %35 = sbr.rel (%p33) target = $region25
    $region24: #{tpu_custom_call.1} parent=1 // pred_region
      %v36 = vld [vmem:[%s3] sm:$0xff]
      %v37 = vld [vmem:[%s3 + $0x8] sm:$0xff]
      %v38 = vld [vmem:[%s3 + $0x10] sm:$0xff]
      %v39 = vld [vmem:[%s3 + $0x18] sm:$0xff]
      %v40 = vld [vmem:[%s3 + $0x20] sm:$0xff]
      %v41 = vld [vmem:[%s3 + $0x28] sm:$0xff]
      %v42 = vld [vmem:[%s3 + $0x30] sm:$0xff]
      %v43 = vld [vmem:[%s3 + $0x38] sm:$0xff]
      %v44 = vld [vmem:[%s3 + $0x40] sm:$0xff]
      %v45 = vld [vmem:[%s3 + $0x48] sm:$0xff]
      %v46 = vld [vmem:[%s3 + $0x50] sm:$0xff]
      %v47 = vld [vmem:[%s3 + $0x58] sm:$0xff]
      %v48 = vld [vmem:[%s3 + $0x60] sm:$0xff]
      %v49 = vld [vmem:[%s3 + $0x68] sm:$0xff]
      %v50 = vld [vmem:[%s3 + $0x70] sm:$0xff]
      %v51 = vld [vmem:[%s3 + $0x78] sm:$0xff]
      %53 = vset.pattern.permute.xlu0 0
      %54 = vperm.xlu0 %53, %v36
      %v55 = vpop.permute.xlu0 %54
      %58 = vset.pattern.permute.xlu0 0
      %59 = vperm.xlu0 %58, %v37
      %v60 = vpop.permute.xlu0 %59
      %63 = vset.pattern.permute.xlu0 0
      %64 = vperm.xlu0 %63, %v38
      %v65 = vpop.permute.xlu0 %64
      %68 = vset.pattern.permute.xlu0 0
      %69 = vperm.xlu0 %68, %v39
      %v70 = vpop.permute.xlu0 %69
      %73 = vset.pattern.permute.xlu0 0
      %74 = vperm.xlu0 %73, %v40
      %v75 = vpop.permute.xlu0 %74
      %78 = vset.pattern.permute.xlu0 0
      %79 = vperm.xlu0 %78, %v41
      %v80 = vpop.permute.xlu0 %79
      %83 = vset.pattern.permute.xlu0 0
      %84 = vperm.xlu0 %83, %v42
      %v85 = vpop.permute.xlu0 %84
      %88 = vset.pattern.permute.xlu0 0
      %89 = vperm.xlu0 %88, %v43
      %v90 = vpop.permute.xlu0 %89
      %93 = vset.pattern.permute.xlu0 0
      %94 = vperm.xlu0 %93, %v44
      %v95 = vpop.permute.xlu0 %94
      %98 = vset.pattern.permute.xlu0 0
      %99 = vperm.xlu0 %98, %v45
      %v100 = vpop.permute.xlu0 %99
      %103 = vset.pattern.permute.xlu0 0
      %104 = vperm.xlu0 %103, %v46
      %v105 = vpop.permute.xlu0 %104
      %108 = vset.pattern.permute.xlu0 0
      %109 = vperm.xlu0 %108, %v47
      %v110 = vpop.permute.xlu0 %109
      %113 = vset.pattern.permute.xlu0 0
      %114 = vperm.xlu0 %113, %v48
      %v115 = vpop.permute.xlu0 %114
      %118 = vset.pattern.permute.xlu0 0
      %119 = vperm.xlu0 %118, %v49
      %v120 = vpop.permute.xlu0 %119
      %123 = vset.pattern.permute.xlu0 0
      %124 = vperm.xlu0 %123, %v50
      %v125 = vpop.permute.xlu0 %124
      %128 = vset.pattern.permute.xlu0 0
      %129 = vperm.xlu0 %128, %v51
      %v130 = vpop.permute.xlu0 %129
      %vm132 = vcmask 15360
      %133 = vst.msk [vmem:[%s4] sm:$0xff] %vm132, %v55
      %134 = vst.msk [vmem:[%s4 + $0x8] sm:$0xff] %vm132, %v60
      %135 = vst.msk [vmem:[%s4 + $0x10] sm:$0xff] %vm132, %v65
      %136 = vst.msk [vmem:[%s4 + $0x18] sm:$0xff] %vm132, %v70
      %137 = vst.msk [vmem:[%s4 + $0x20] sm:$0xff] %vm132, %v75
      %138 = vst.msk [vmem:[%s4 + $0x28] sm:$0xff] %vm132, %v80
      %139 = vst.msk [vmem:[%s4 + $0x30] sm:$0xff] %vm132, %v85
      %140 = vst.msk [vmem:[%s4 + $0x38] sm:$0xff] %vm132, %v90
      %141 = vst.msk [vmem:[%s4 + $0x40] sm:$0xff] %vm132, %v95
      %142 = vst.msk [vmem:[%s4 + $0x48] sm:$0xff] %vm132, %v100
      %143 = vst.msk [vmem:[%s4 + $0x50] sm:$0xff] %vm132, %v105
      %144 = vst.msk [vmem:[%s4 + $0x58] sm:$0xff] %vm132, %v110
      %145 = vst.msk [vmem:[%s4 + $0x60] sm:$0xff] %vm132, %v115
      %146 = vst.msk [vmem:[%s4 + $0x68] sm:$0xff] %vm132, %v120
      %147 = vst.msk [vmem:[%s4 + $0x70] sm:$0xff] %vm132, %v125
      %148 = vst.msk [vmem:[%s4 + $0x78] sm:$0xff] %vm132, %v130
    $region25: #{tpu_custom_call.1} parent=1 // pred_fallthru
      _
    %v149 = vld [vmem:[%s0] sm:$0xff]
    %v150 = vld [vmem:[%s0 + $0x8] sm:$0xff]
    %v151 = vld [vmem:[%s0 + $0x10] sm:$0xff]
    %v152 = vld [vmem:[%s0 + $0x18] sm:$0xff]
    %v157 = vcombine.high %v149, %v149
    %v159 = vunpack.c.l.s4 1966171168
    %v160 = vunpack.c.0.s8 %v159
    %v161 = vlaneseq
    %v162 = vshrl.u32 %v161, 7
    %v163 = vsub.s32 %v160, %v162
    %v164 = vrot.slane %v149, %v163
    %v166 = vunpack.c.l.s4 1966171168
    %v167 = vunpack.c.0.s8 %v166
    %v168 = vlaneseq
    %v169 = vshrl.u32 %v168, 7
    %v170 = vsub.s32 %v167, %v169
    %v171 = vrot.slane %v157, %v170
    %v172 = vcombine.high %v164, %v164
    %v173 = vcombine.high %v171, %v171
    %v175 = vunpack.c.l.s4 1966171168
    %v176 = vunpack.c.0.s8 %v175
    %v177 = vlaneseq
    %v178 = vshrl.u32 %v177, 7
    %v179 = vsub.s32 %v176, %v178
    %v180 = vrot.slane %v164, %v179
    %v182 = vunpack.c.l.s4 1966171168
    %v183 = vunpack.c.0.s8 %v182
    %v184 = vlaneseq
    %v185 = vshrl.u32 %v184, 7
    %v186 = vsub.s32 %v183, %v185
    %v187 = vrot.slane %v171, %v186
    %v189 = vunpack.c.l.s4 1966171168
    %v190 = vunpack.c.0.s8 %v189
    %v191 = vlaneseq
    %v192 = vshrl.u32 %v191, 7
    %v193 = vsub.s32 %v190, %v192
    %v194 = vrot.slane %v172, %v193
    %v196 = vunpack.c.l.s4 1966171168
    %v197 = vunpack.c.0.s8 %v196
    %v198 = vlaneseq
    %v199 = vshrl.u32 %v198, 7
    %v200 = vsub.s32 %v197, %v199
    %v201 = vrot.slane %v173, %v200
    %v202 = vcombine.high %v180, %v180
    %v203 = vcombine.high %v187, %v187
    %v204 = vcombine.high %v194, %v194
    %v205 = vcombine.high %v201, %v201
    %v206 = vcombine.high %v150, %v150
    %v208 = vunpack.c.l.s4 1966171168
    %v209 = vunpack.c.0.s8 %v208
    %v210 = vlaneseq
    %v211 = vshrl.u32 %v210, 7
    %v212 = vsub.s32 %v209, %v211
    %v213 = vrot.slane %v150, %v212
    %v215 = vunpack.c.l.s4 1966171168
    %v216 = vunpack.c.0.s8 %v215
    %v217 = vlaneseq
    %v218 = vshrl.u32 %v217, 7
    %v219 = vsub.s32 %v216, %v218
    %v220 = vrot.slane %v206, %v219
    %v221 = vcombine.high %v213, %v213
    %v222 = vcombine.high %v220, %v220
    %v224 = vunpack.c.l.s4 1966171168
    %v225 = vunpack.c.0.s8 %v224
    %v226 = vlaneseq
    %v227 = vshrl.u32 %v226, 7
    %v228 = vsub.s32 %v225, %v227
    %v229 = vrot.slane %v213, %v228
    %v231 = vunpack.c.l.s4 1966171168
    %v232 = vunpack.c.0.s8 %v231
    %v233 = vlaneseq
    %v234 = vshrl.u32 %v233, 7
    %v235 = vsub.s32 %v232, %v234
    %v236 = vrot.slane %v220, %v235
    %v238 = vunpack.c.l.s4 1966171168
    %v239 = vunpack.c.0.s8 %v238
    %v240 = vlaneseq
    %v241 = vshrl.u32 %v240, 7
    %v242 = vsub.s32 %v239, %v241
    %v243 = vrot.slane %v221, %v242
    %v245 = vunpack.c.l.s4 1966171168
    %v246 = vunpack.c.0.s8 %v245
    %v247 = vlaneseq
    %v248 = vshrl.u32 %v247, 7
    %v249 = vsub.s32 %v246, %v248
    %v250 = vrot.slane %v222, %v249
    %v251 = vcombine.high %v229, %v229
    %v252 = vcombine.high %v236, %v236
    %v253 = vcombine.high %v243, %v243
    %v254 = vcombine.high %v250, %v250
    %v255 = vcombine.high %v151, %v151
    %v257 = vunpack.c.l.s4 1966171168
    %v258 = vunpack.c.0.s8 %v257
    %v259 = vlaneseq
    %v260 = vshrl.u32 %v259, 7
    %v261 = vsub.s32 %v258, %v260
    %v262 = vrot.slane %v151, %v261
    %v264 = vunpack.c.l.s4 1966171168
    %v265 = vunpack.c.0.s8 %v264
    %v266 = vlaneseq
    %v267 = vshrl.u32 %v266, 7
    %v268 = vsub.s32 %v265, %v267
    %v269 = vrot.slane %v255, %v268
    %v270 = vcombine.high %v262, %v262
    %v271 = vcombine.high %v269, %v269
    %v273 = vunpack.c.l.s4 1966171168
    %v274 = vunpack.c.0.s8 %v273
    %v275 = vlaneseq
    %v276 = vshrl.u32 %v275, 7
    %v277 = vsub.s32 %v274, %v276
    %v278 = vrot.slane %v262, %v277
    %v280 = vunpack.c.l.s4 1966171168
    %v281 = vunpack.c.0.s8 %v280
    %v282 = vlaneseq
    %v283 = vshrl.u32 %v282, 7
    %v284 = vsub.s32 %v281, %v283
    %v285 = vrot.slane %v269, %v284
    %v287 = vunpack.c.l.s4 1966171168
    %v288 = vunpack.c.0.s8 %v287
    %v289 = vlaneseq
    %v290 = vshrl.u32 %v289, 7
    %v291 = vsub.s32 %v288, %v290
    %v292 = vrot.slane %v270, %v291
    %v294 = vunpack.c.l.s4 1966171168
    %v295 = vunpack.c.0.s8 %v294
    %v296 = vlaneseq
    %v297 = vshrl.u32 %v296, 7
    %v298 = vsub.s32 %v295, %v297
    %v299 = vrot.slane %v271, %v298
    %v300 = vcombine.high %v278, %v278
    %v301 = vcombine.high %v285, %v285
    %v302 = vcombine.high %v292, %v292
    %v303 = vcombine.high %v299, %v299
    %v304 = vcombine.high %v152, %v152
    %v306 = vunpack.c.l.s4 1966171168
    %v307 = vunpack.c.0.s8 %v306
    %v308 = vlaneseq
    %v309 = vshrl.u32 %v308, 7
    %v310 = vsub.s32 %v307, %v309
    %v311 = vrot.slane %v152, %v310
    %v313 = vunpack.c.l.s4 1966171168
    %v314 = vunpack.c.0.s8 %v313
    %v315 = vlaneseq
    %v316 = vshrl.u32 %v315, 7
    %v317 = vsub.s32 %v314, %v316
    %v318 = vrot.slane %v304, %v317
    %v319 = vcombine.high %v311, %v311
    %v320 = vcombine.high %v318, %v318
    %v322 = vunpack.c.l.s4 1966171168
    %v323 = vunpack.c.0.s8 %v322
    %v324 = vlaneseq
    %v325 = vshrl.u32 %v324, 7
    %v326 = vsub.s32 %v323, %v325
    %v327 = vrot.slane %v311, %v326
    %v329 = vunpack.c.l.s4 1966171168
    %v330 = vunpack.c.0.s8 %v329
    %v331 = vlaneseq
    %v332 = vshrl.u32 %v331, 7
    %v333 = vsub.s32 %v330, %v332
    %v334 = vrot.slane %v318, %v333
    %v336 = vunpack.c.l.s4 1966171168
    %v337 = vunpack.c.0.s8 %v336
    %v338 = vlaneseq
    %v339 = vshrl.u32 %v338, 7
    %v340 = vsub.s32 %v337, %v339
    %v341 = vrot.slane %v319, %v340
    %v343 = vunpack.c.l.s4 1966171168
    %v344 = vunpack.c.0.s8 %v343
    %v345 = vlaneseq
    %v346 = vshrl.u32 %v345, 7
    %v347 = vsub.s32 %v344, %v346
    %v348 = vrot.slane %v320, %v347
    %v349 = vcombine.high %v327, %v327
    %v350 = vcombine.high %v334, %v334
    %v351 = vcombine.high %v341, %v341
    %v352 = vcombine.high %v348, %v348
    %v353 = vld [vmem:[%s1] sm:$0xff]
    %v354 = vld [vmem:[%s1 + $0x8] sm:$0xff]
    %v355 = vlaneseq
    %v356 = vshrl.u32 %v355, 7
    %v357 = vsub.s32 0, %v356
    %v358 = vrot.slane %v180, %v357
    %v359 = vlaneseq
    %v360 = vshrl.u32 %v359, 7
    %v361 = vsub.s32 0, %v360
    %v362 = vrot.slane %v194, %v361
    %v363 = vlaneseq
    %v364 = vshrl.u32 %v363, 7
    %v365 = vsub.s32 0, %v364
    %v366 = vrot.slane %v202, %v365
    %v367 = vlaneseq
    %v368 = vshrl.u32 %v367, 7
    %v369 = vsub.s32 0, %v368
    %v370 = vrot.slane %v204, %v369
    %v371 = vlaneseq
    %v372 = vshrl.u32 %v371, 7
    %v373 = vsub.s32 0, %v372
    %v374 = vrot.slane %v187, %v373
    %v375 = vlaneseq
    %v376 = vshrl.u32 %v375, 7
    %v377 = vsub.s32 0, %v376
    %v378 = vrot.slane %v201, %v377
    %v379 = vlaneseq
    %v380 = vshrl.u32 %v379, 7
    %v381 = vsub.s32 0, %v380
    %v382 = vrot.slane %v203, %v381
    %v383 = vlaneseq
    %v384 = vshrl.u32 %v383, 7
    %v385 = vsub.s32 0, %v384
    %v386 = vrot.slane %v205, %v385
    %v387 = vlaneseq
    %v388 = vshrl.u32 %v387, 7
    %v389 = vsub.s32 0, %v388
    %v390 = vrot.slane %v229, %v389
    %v391 = vlaneseq
    %v392 = vshrl.u32 %v391, 7
    %v393 = vsub.s32 0, %v392
    %v394 = vrot.slane %v243, %v393
    %v395 = vlaneseq
    %v396 = vshrl.u32 %v395, 7
    %v397 = vsub.s32 0, %v396
    %v398 = vrot.slane %v251, %v397
    %v399 = vlaneseq
    %v400 = vshrl.u32 %v399, 7
    %v401 = vsub.s32 0, %v400
    %v402 = vrot.slane %v253, %v401
    %v403 = vlaneseq
    %v404 = vshrl.u32 %v403, 7
    %v405 = vsub.s32 0, %v404
    %v406 = vrot.slane %v236, %v405
    %v407 = vlaneseq
    %v408 = vshrl.u32 %v407, 7
    %v409 = vsub.s32 0, %v408
    %v410 = vrot.slane %v250, %v409
    %v411 = vlaneseq
    %v412 = vshrl.u32 %v411, 7
    %v413 = vsub.s32 0, %v412
    %v414 = vrot.slane %v252, %v413
    %v415 = vlaneseq
    %v416 = vshrl.u32 %v415, 7
    %v417 = vsub.s32 0, %v416
    %v418 = vrot.slane %v254, %v417
    %v419 = vlaneseq
    %v420 = vshrl.u32 %v419, 7
    %v421 = vsub.s32 0, %v420
    %v422 = vrot.slane %v278, %v421
    %v423 = vlaneseq
    %v424 = vshrl.u32 %v423, 7
    %v425 = vsub.s32 0, %v424
    %v426 = vrot.slane %v292, %v425
    %v427 = vlaneseq
    %v428 = vshrl.u32 %v427, 7
    %v429 = vsub.s32 0, %v428
    %v430 = vrot.slane %v300, %v429
    %v431 = vlaneseq
    %v432 = vshrl.u32 %v431, 7
    %v433 = vsub.s32 0, %v432
    %v434 = vrot.slane %v302, %v433
    %v435 = vlaneseq
    %v436 = vshrl.u32 %v435, 7
    %v437 = vsub.s32 0, %v436
    %v438 = vrot.slane %v285, %v437
    %v439 = vlaneseq
    %v440 = vshrl.u32 %v439, 7
    %v441 = vsub.s32 0, %v440
    %v442 = vrot.slane %v299, %v441
    %v443 = vlaneseq
    %v444 = vshrl.u32 %v443, 7
    %v445 = vsub.s32 0, %v444
    %v446 = vrot.slane %v301, %v445
    %v447 = vlaneseq
    %v448 = vshrl.u32 %v447, 7
    %v449 = vsub.s32 0, %v448
    %v450 = vrot.slane %v303, %v449
    %v451 = vlaneseq
    %v452 = vshrl.u32 %v451, 7
    %v453 = vsub.s32 0, %v452
    %v454 = vrot.slane %v327, %v453
    %v455 = vlaneseq
    %v456 = vshrl.u32 %v455, 7
    %v457 = vsub.s32 0, %v456
    %v458 = vrot.slane %v341, %v457
    %v459 = vlaneseq
    %v460 = vshrl.u32 %v459, 7
    %v461 = vsub.s32 0, %v460
    %v462 = vrot.slane %v349, %v461
    %v463 = vlaneseq
    %v464 = vshrl.u32 %v463, 7
    %v465 = vsub.s32 0, %v464
    %v466 = vrot.slane %v351, %v465
    %v467 = vlaneseq
    %v468 = vshrl.u32 %v467, 7
    %v469 = vsub.s32 0, %v468
    %v470 = vrot.slane %v334, %v469
    %v471 = vlaneseq
    %v472 = vshrl.u32 %v471, 7
    %v473 = vsub.s32 0, %v472
    %v474 = vrot.slane %v348, %v473
    %v475 = vlaneseq
    %v476 = vshrl.u32 %v475, 7
    %v477 = vsub.s32 0, %v476
    %v478 = vrot.slane %v350, %v477
    %v479 = vlaneseq
    %v480 = vshrl.u32 %v479, 7
    %v481 = vsub.s32 0, %v480
    %v482 = vrot.slane %v352, %v481
    %v515 = vmul.f32 %v358, %v353
    %v516 = vmul.f32 %v358, %v354
    %v517 = vmul.f32 %v362, %v353
    %v518 = vmul.f32 %v362, %v354
    %v519 = vmul.f32 %v366, %v353
    %v520 = vmul.f32 %v366, %v354
    %v521 = vmul.f32 %v370, %v353
    %v522 = vmul.f32 %v370, %v354
    %v523 = vmul.f32 %v374, %v353
    %v524 = vmul.f32 %v374, %v354
    %v525 = vmul.f32 %v378, %v353
    %v526 = vmul.f32 %v378, %v354
    %v527 = vmul.f32 %v382, %v353
    %v528 = vmul.f32 %v382, %v354
    %v529 = vmul.f32 %v386, %v353
    %v530 = vmul.f32 %v386, %v354
    %v531 = vmul.f32 %v390, %v353
    %v532 = vmul.f32 %v390, %v354
    %v533 = vmul.f32 %v394, %v353
    %v534 = vmul.f32 %v394, %v354
    %v535 = vmul.f32 %v398, %v353
    %v536 = vmul.f32 %v398, %v354
    %v537 = vmul.f32 %v402, %v353
    %v538 = vmul.f32 %v402, %v354
    %v539 = vmul.f32 %v406, %v353
    %v540 = vmul.f32 %v406, %v354
    %v541 = vmul.f32 %v410, %v353
    %v542 = vmul.f32 %v410, %v354
    %v543 = vmul.f32 %v414, %v353
    %v544 = vmul.f32 %v414, %v354
    %v545 = vmul.f32 %v418, %v353
    %v546 = vmul.f32 %v418, %v354
    %v547 = vmul.f32 %v422, %v353
    %v548 = vmul.f32 %v422, %v354
    %v549 = vmul.f32 %v426, %v353
    %v550 = vmul.f32 %v426, %v354
    %v551 = vmul.f32 %v430, %v353
    %v552 = vmul.f32 %v430, %v354
    %v553 = vmul.f32 %v434, %v353
    %v554 = vmul.f32 %v434, %v354
    %v555 = vmul.f32 %v438, %v353
    %v556 = vmul.f32 %v438, %v354
    %v557 = vmul.f32 %v442, %v353
    %v558 = vmul.f32 %v442, %v354
    %v559 = vmul.f32 %v446, %v353
    %v560 = vmul.f32 %v446, %v354
    %v561 = vmul.f32 %v450, %v353
    %v562 = vmul.f32 %v450, %v354
    %v563 = vmul.f32 %v454, %v353
    %v564 = vmul.f32 %v454, %v354
    %v565 = vmul.f32 %v458, %v353
    %v566 = vmul.f32 %v458, %v354
    %v567 = vmul.f32 %v462, %v353
    %v568 = vmul.f32 %v462, %v354
    %v569 = vmul.f32 %v466, %v353
    %v570 = vmul.f32 %v466, %v354
    %v571 = vmul.f32 %v470, %v353
    %v572 = vmul.f32 %v470, %v354
    %v573 = vmul.f32 %v474, %v353
    %v574 = vmul.f32 %v474, %v354
    %v575 = vmul.f32 %v478, %v353
    %v576 = vmul.f32 %v478, %v354
    %v577 = vmul.f32 %v482, %v353
    %v578 = vmul.f32 %v482, %v354
    %v579 = vpack.c.bf16 %v516, %v515
    %v580 = vpack.c.bf16 %v518, %v517
    %v581 = vpack.c.bf16 %v520, %v519
    %v582 = vpack.c.bf16 %v522, %v521
    %v583 = vpack.c.bf16 %v524, %v523
    %v584 = vpack.c.bf16 %v526, %v525
    %v585 = vpack.c.bf16 %v528, %v527
    %v586 = vpack.c.bf16 %v530, %v529
    %v587 = vpack.c.bf16 %v532, %v531
    %v588 = vpack.c.bf16 %v534, %v533
    %v589 = vpack.c.bf16 %v536, %v535
    %v590 = vpack.c.bf16 %v538, %v537
    %v591 = vpack.c.bf16 %v540, %v539
    %v592 = vpack.c.bf16 %v542, %v541
    %v593 = vpack.c.bf16 %v544, %v543
    %v594 = vpack.c.bf16 %v546, %v545
    %v595 = vpack.c.bf16 %v548, %v547
    %v596 = vpack.c.bf16 %v550, %v549
    %v597 = vpack.c.bf16 %v552, %v551
    %v598 = vpack.c.bf16 %v554, %v553
    %v599 = vpack.c.bf16 %v556, %v555
    %v600 = vpack.c.bf16 %v558, %v557
    %v601 = vpack.c.bf16 %v560, %v559
    %v602 = vpack.c.bf16 %v562, %v561
    %v603 = vpack.c.bf16 %v564, %v563
    %v604 = vpack.c.bf16 %v566, %v565
    %v605 = vpack.c.bf16 %v568, %v567
    %v606 = vpack.c.bf16 %v570, %v569
    %v607 = vpack.c.bf16 %v572, %v571
    %v608 = vpack.c.bf16 %v574, %v573
    %v609 = vpack.c.bf16 %v576, %v575
    %v610 = vpack.c.bf16 %v578, %v577
    %v611 = vld [vmem:[%s4] sm:$0xff]
    %v612 = vld [vmem:[%s4 + $0x8] sm:$0xff]
    %v613 = vld [vmem:[%s4 + $0x10] sm:$0xff]
    %v614 = vld [vmem:[%s4 + $0x18] sm:$0xff]
    %v615 = vld [vmem:[%s4 + $0x20] sm:$0xff]
    %v616 = vld [vmem:[%s4 + $0x28] sm:$0xff]
    %v617 = vld [vmem:[%s4 + $0x30] sm:$0xff]
    %v618 = vld [vmem:[%s4 + $0x38] sm:$0xff]
    %v619 = vld [vmem:[%s4 + $0x40] sm:$0xff]
    %v620 = vld [vmem:[%s4 + $0x48] sm:$0xff]
    %v621 = vld [vmem:[%s4 + $0x50] sm:$0xff]
    %v622 = vld [vmem:[%s4 + $0x58] sm:$0xff]
    %v623 = vld [vmem:[%s4 + $0x60] sm:$0xff]
    %v624 = vld [vmem:[%s4 + $0x68] sm:$0xff]
    %v625 = vld [vmem:[%s4 + $0x70] sm:$0xff]
    %v626 = vld [vmem:[%s4 + $0x78] sm:$0xff]
    %v627 = vld [vmem:[#allocation2] sm:$0xff]
    %v628 = vld [vmem:[#allocation2 + $0x8] sm:$0xff]
    %v629 = vld [vmem:[#allocation2 + $0x10] sm:$0xff]
    %v630 = vld [vmem:[#allocation2 + $0x18] sm:$0xff]
    %v631 = vld [vmem:[#allocation2 + $0x20] sm:$0xff]
    %v632 = vld [vmem:[#allocation2 + $0x28] sm:$0xff]
    %v633 = vld [vmem:[#allocation2 + $0x30] sm:$0xff]
    %v634 = vld [vmem:[#allocation2 + $0x38] sm:$0xff]
    %v635 = vld [vmem:[#allocation2 + $0x40] sm:$0xff]
    %v636 = vld [vmem:[#allocation2 + $0x48] sm:$0xff]
    %v637 = vld [vmem:[#allocation2 + $0x50] sm:$0xff]
    %v638 = vld [vmem:[#allocation2 + $0x58] sm:$0xff]
    %v639 = vld [vmem:[#allocation2 + $0x60] sm:$0xff]
    %v640 = vld [vmem:[#allocation2 + $0x68] sm:$0xff]
    %v641 = vld [vmem:[#allocation2 + $0x70] sm:$0xff]
    %v642 = vld [vmem:[#allocation2 + $0x78] sm:$0xff]
    %v643 = vld [vmem:[#allocation2 + $0x80] sm:$0xff]
    %v644 = vld [vmem:[#allocation2 + $0x88] sm:$0xff]
    %v645 = vld [vmem:[#allocation2 + $0x90] sm:$0xff]
    %v646 = vld [vmem:[#allocation2 + $0x98] sm:$0xff]
    %v647 = vld [vmem:[#allocation2 + $0xa0] sm:$0xff]
    %v648 = vld [vmem:[#allocation2 + $0xa8] sm:$0xff]
    %v649 = vld [vmem:[#allocation2 + $0xb0] sm:$0xff]
    %v650 = vld [vmem:[#allocation2 + $0xb8] sm:$0xff]
    %v651 = vld [vmem:[#allocation2 + $0xc0] sm:$0xff]
    %v652 = vld [vmem:[#allocation2 + $0xc8] sm:$0xff]
    %v653 = vld [vmem:[#allocation2 + $0xd0] sm:$0xff]
    %v654 = vld [vmem:[#allocation2 + $0xd8] sm:$0xff]
    %v655 = vld [vmem:[#allocation2 + $0xe0] sm:$0xff]
    %v656 = vld [vmem:[#allocation2 + $0xe8] sm:$0xff]
    %v657 = vld [vmem:[#allocation2 + $0xf0] sm:$0xff]
    %v658 = vld [vmem:[#allocation2 + $0xf8] sm:$0xff]
    %v691 = vunpack.c.l.b16 %v627
    %v692 = vunpack.c.h.b16 %v627
    %v693 = vunpack.c.l.b16 %v628
    %v694 = vunpack.c.h.b16 %v628
    %v695 = vunpack.c.l.b16 %v629
    %v696 = vunpack.c.h.b16 %v629
    %v697 = vunpack.c.l.b16 %v630
    %v698 = vunpack.c.h.b16 %v630
    %v699 = vunpack.c.l.b16 %v631
    %v700 = vunpack.c.h.b16 %v631
    %v701 = vunpack.c.l.b16 %v632
    %v702 = vunpack.c.h.b16 %v632
    %v703 = vunpack.c.l.b16 %v633
    %v704 = vunpack.c.h.b16 %v633
    %v705 = vunpack.c.l.b16 %v634
    %v706 = vunpack.c.h.b16 %v634
    %v707 = vunpack.c.l.b16 %v635
    %v708 = vunpack.c.h.b16 %v635
    %v709 = vunpack.c.l.b16 %v636
    %v710 = vunpack.c.h.b16 %v636
    %v711 = vunpack.c.l.b16 %v637
    %v712 = vunpack.c.h.b16 %v637
    %v713 = vunpack.c.l.b16 %v638
    %v714 = vunpack.c.h.b16 %v638
    %v715 = vunpack.c.l.b16 %v639
    %v716 = vunpack.c.h.b16 %v639
    %v717 = vunpack.c.l.b16 %v640
    %v718 = vunpack.c.h.b16 %v640
    %v719 = vunpack.c.l.b16 %v641
    %v720 = vunpack.c.h.b16 %v641
    %v721 = vunpack.c.l.b16 %v642
    %v722 = vunpack.c.h.b16 %v642
    %v723 = vunpack.c.l.b16 %v643
    %v724 = vunpack.c.h.b16 %v643
    %v725 = vunpack.c.l.b16 %v644
    %v726 = vunpack.c.h.b16 %v644
    %v727 = vunpack.c.l.b16 %v645
    %v728 = vunpack.c.h.b16 %v645
    %v729 = vunpack.c.l.b16 %v646
    %v730 = vunpack.c.h.b16 %v646
    %v731 = vunpack.c.l.b16 %v647
    %v732 = vunpack.c.h.b16 %v647
    %v733 = vunpack.c.l.b16 %v648
    %v734 = vunpack.c.h.b16 %v648
    %v735 = vunpack.c.l.b16 %v649
    %v736 = vunpack.c.h.b16 %v649
    %v737 = vunpack.c.l.b16 %v650
    %v738 = vunpack.c.h.b16 %v650
    %v739 = vunpack.c.l.b16 %v651
    %v740 = vunpack.c.h.b16 %v651
    %v741 = vunpack.c.l.b16 %v652
    %v742 = vunpack.c.h.b16 %v652
    %v743 = vunpack.c.l.b16 %v653
    %v744 = vunpack.c.h.b16 %v653
    %v745 = vunpack.c.l.b16 %v654
    %v746 = vunpack.c.h.b16 %v654
    %v747 = vunpack.c.l.b16 %v655
    %v748 = vunpack.c.h.b16 %v655
    %v749 = vunpack.c.l.b16 %v656
    %v750 = vunpack.c.h.b16 %v656
    %v751 = vunpack.c.l.b16 %v657
    %v752 = vunpack.c.h.b16 %v657
    %v753 = vunpack.c.l.b16 %v658
    %v754 = vunpack.c.h.b16 %v658
    %v755 = vpack.c.b16 %v695, %v691
    %v756 = vpack.c.b16 %v696, %v692
    %v757 = vpack.c.b16 %v697, %v693
    %v758 = vpack.c.b16 %v698, %v694
    %v759 = vpack.c.b16 %v703, %v699
    %v760 = vpack.c.b16 %v704, %v700
    %v761 = vpack.c.b16 %v705, %v701
    %v762 = vpack.c.b16 %v706, %v702
    %v763 = vpack.c.b16 %v711, %v707
    %v764 = vpack.c.b16 %v712, %v708
    %v765 = vpack.c.b16 %v713, %v709
    %v766 = vpack.c.b16 %v714, %v710
    %v767 = vpack.c.b16 %v719, %v715
    %v768 = vpack.c.b16 %v720, %v716
    %v769 = vpack.c.b16 %v721, %v717
    %v770 = vpack.c.b16 %v722, %v718
    %v771 = vpack.c.b16 %v727, %v723
    %v772 = vpack.c.b16 %v728, %v724
    %v773 = vpack.c.b16 %v729, %v725
    %v774 = vpack.c.b16 %v730, %v726
    %v775 = vpack.c.b16 %v735, %v731
    %v776 = vpack.c.b16 %v736, %v732
    %v777 = vpack.c.b16 %v737, %v733
    %v778 = vpack.c.b16 %v738, %v734
    %v779 = vpack.c.b16 %v743, %v739
    %v780 = vpack.c.b16 %v744, %v740
    %v781 = vpack.c.b16 %v745, %v741
    %v782 = vpack.c.b16 %v746, %v742
    %v783 = vpack.c.b16 %v751, %v747
    %v784 = vpack.c.b16 %v752, %v748
    %v785 = vpack.c.b16 %v753, %v749
    %v786 = vpack.c.b16 %v754, %v750
    %819 = vmatprep.subr.bf16.mxu0 0
    %820 = vmatpush1.bf16.msra.mxu0 %v579
    %821 = vmatprep.subr.bf16.mxu0 0
    %822 = vmatpush1.bf16.msra.mxu0 %v580
    %823 = vmatprep.subr.bf16.mxu0 0
    %824 = vmatpush1.bf16.msra.mxu0 %v581
    %825 = vmatprep.subr.bf16.mxu0 0
    %826 = vmatpush1.bf16.msra.mxu0 %v582
    %827 = vmatprep.subr.bf16.mxu0 0
    %828 = vmatpush1.bf16.msra.mxu0 %v583
    %829 = vmatprep.subr.bf16.mxu0 0
    %830 = vmatpush1.bf16.msra.mxu0 %v584
    %831 = vmatprep.subr.bf16.mxu0 0
    %832 = vmatpush1.bf16.msra.mxu0 %v585
    %833 = vmatprep.subr.bf16.mxu0 0
    %834 = vmatpush1.bf16.msra.mxu0 %v586
    %835 = vmatprep.subr.bf16.mxu0 0
    %836 = vmatpush1.bf16.msra.mxu0 %v587
    %837 = vmatprep.subr.bf16.mxu0 0
    %838 = vmatpush1.bf16.msra.mxu0 %v588
    %839 = vmatprep.subr.bf16.mxu0 0
    %840 = vmatpush1.bf16.msra.mxu0 %v589
    %841 = vmatprep.subr.bf16.mxu0 0
    %842 = vmatpush1.bf16.msra.mxu0 %v590
    %843 = vmatprep.subr.bf16.mxu0 0
    %844 = vmatpush1.bf16.msra.mxu0 %v591
    %845 = vmatprep.subr.bf16.mxu0 0
    %846 = vmatpush1.bf16.msra.mxu0 %v592
    %847 = vmatprep.subr.bf16.mxu0 0
    %848 = vmatpush1.bf16.msra.mxu0 %v593
    %849 = vmatprep.subr.bf16.mxu0 0
    %850 = vmatpush1.bf16.msra.mxu0 %v594
    %851 = vmatprep.mubr.bf16.mxu0 %v756
    %852 = vmatmul.mubr.bf16.gmra.mrb[0].mxu0 %v755
    %v853 = vpop.f32.mrb[0].mxu0
    %v854 = vadd.f32 0.0, %v853
    %v855 = vpop.f32.mrb[0].mxu0
    %v856 = vpop.f32.mrb[0].mxu0
    %v857 = vadd.f32 0.0, %v856
    %v858 = vpop.f32.mrb[0].mxu0
    %859 = vmatprep.mubr.bf16.mxu0 %v760
    %860 = vmatmul.mubr.bf16.gmra.mrb[0].mxu0 %v759
    %v861 = vpop.f32.mrb[0].mxu0
    %v862 = vadd.f32 0.0, %v861
    %v863 = vpop.f32.mrb[0].mxu0
    %v864 = vpop.f32.mrb[0].mxu0
    %v865 = vadd.f32 0.0, %v864
    %v866 = vpop.f32.mrb[0].mxu0
    %867 = vmatprep.mubr.bf16.mxu0 %v764
    %868 = vmatmul.mubr.bf16.gmra.mrb[0].mxu0 %v763
    %v869 = vpop.f32.mrb[0].mxu0
    %v870 = vadd.f32 0.0, %v869
    %v871 = vpop.f32.mrb[0].mxu0
    %v872 = vpop.f32.mrb[0].mxu0
    %v873 = vadd.f32 0.0, %v872
    %v874 = vpop.f32.mrb[0].mxu0
    %875 = vmatprep.mubr.bf16.mxu0 %v768
    %876 = vmatmul.mubr.bf16.gmra.mrb[0].mxu0 %v767
    %v877 = vpop.f32.mrb[0].mxu0
    %v878 = vadd.f32 0.0, %v877
    %v879 = vpop.f32.mrb[0].mxu0
    %v880 = vpop.f32.mrb[0].mxu0
    %v881 = vadd.f32 0.0, %v880
    %v882 = vpop.f32.mrb[0].mxu0
    %883 = vmatprep.mubr.bf16.mxu0 %v772
    %884 = vmatmul.mubr.bf16.gmra.mrb[0].mxu0 %v771
    %v885 = vpop.f32.mrb[0].mxu0
    %v886 = vadd.f32 0.0, %v885
    %v887 = vpop.f32.mrb[0].mxu0
    %v888 = vpop.f32.mrb[0].mxu0
    %v889 = vadd.f32 0.0, %v888
    %v890 = vpop.f32.mrb[0].mxu0
    %891 = vmatprep.mubr.bf16.mxu0 %v776
    %892 = vmatmul.mubr.bf16.gmra.mrb[0].mxu0 %v775
    %v893 = vpop.f32.mrb[0].mxu0
    %v894 = vadd.f32 0.0, %v893
    %v895 = vpop.f32.mrb[0].mxu0
    %v896 = vpop.f32.mrb[0].mxu0
    %v897 = vadd.f32 0.0, %v896
    %v898 = vpop.f32.mrb[0].mxu0
    %899 = vmatprep.mubr.bf16.mxu0 %v780
    %900 = vmatmul.mubr.bf16.gmra.mrb[0].mxu0 %v779
    %v901 = vpop.f32.mrb[0].mxu0
    %v902 = vadd.f32 0.0, %v901
    %v903 = vpop.f32.mrb[0].mxu0
    %v904 = vpop.f32.mrb[0].mxu0
    %v905 = vadd.f32 0.0, %v904
    %v906 = vpop.f32.mrb[0].mxu0
    %907 = vmatprep.mubr.bf16.mxu0 %v784
    %908 = vmatmul.mubr.bf16.gmra.mrb[0].mxu0 %v783
    %v909 = vpop.f32.mrb[0].mxu0
    %v910 = vadd.f32 0.0, %v909
    %v911 = vpop.f32.mrb[0].mxu0
    %v912 = vpop.f32.mrb[0].mxu0
    %v913 = vadd.f32 0.0, %v912
    %v914 = vpop.f32.mrb[0].mxu0
    %915 = vdwg.mxu0
    %916 = vmatprep.subr.bf16.mxu0 0
    %917 = vmatpush1.bf16.msra.mxu0 %v595
    %918 = vmatprep.subr.bf16.mxu0 0
    %919 = vmatpush1.bf16.msra.mxu0 %v596
    %920 = vmatprep.subr.bf16.mxu0 0
    %921 = vmatpush1.bf16.msra.mxu0 %v597
    %922 = vmatprep.subr.bf16.mxu0 0
    %923 = vmatpush1.bf16.msra.mxu0 %v598
    %924 = vmatprep.subr.bf16.mxu0 0
    %925 = vmatpush1.bf16.msra.mxu0 %v599
    %926 = vmatprep.subr.bf16.mxu0 0
    %927 = vmatpush1.bf16.msra.mxu0 %v600
    %928 = vmatprep.subr.bf16.mxu0 0
    %929 = vmatpush1.bf16.msra.mxu0 %v601
    %930 = vmatprep.subr.bf16.mxu0 0
    %931 = vmatpush1.bf16.msra.mxu0 %v602
    %932 = vmatprep.subr.bf16.mxu0 0
    %933 = vmatpush1.bf16.msra.mxu0 %v603
    %934 = vmatprep.subr.bf16.mxu0 0
    %935 = vmatpush1.bf16.msra.mxu0 %v604
    %936 = vmatprep.subr.bf16.mxu0 0
    %937 = vmatpush1.bf16.msra.mxu0 %v605
    %938 = vmatprep.subr.bf16.mxu0 0
    %939 = vmatpush1.bf16.msra.mxu0 %v606
    %940 = vmatprep.subr.bf16.mxu0 0
    %941 = vmatpush1.bf16.msra.mxu0 %v607
    %942 = vmatprep.subr.bf16.mxu0 0
    %943 = vmatpush1.bf16.msra.mxu0 %v608
    %944 = vmatprep.subr.bf16.mxu0 0
    %945 = vmatpush1.bf16.msra.mxu0 %v609
    %946 = vmatprep.subr.bf16.mxu0 0
    %947 = vmatpush1.bf16.msra.mxu0 %v610
    %948 = vmatprep.mubr.bf16.mxu0 %v758
    %949 = vmatmul.mubr.bf16.gmra.mrb[0].mxu0 %v757
    %v950 = vpop.f32.mrb[0].mxu0
    %v951 = vadd.f32 %v854, %v950
    %v952 = vpop.f32.mrb[0].mxu0
    %v953 = vpop.f32.mrb[0].mxu0
    %v954 = vadd.f32 %v857, %v953
    %v955 = vpop.f32.mrb[0].mxu0
    %956 = vmatprep.mubr.bf16.mxu0 %v762
    %957 = vmatmul.mubr.bf16.gmra.mrb[0].mxu0 %v761
    %v958 = vpop.f32.mrb[0].mxu0
    %v959 = vadd.f32 %v862, %v958
    %v960 = vpop.f32.mrb[0].mxu0
    %v961 = vpop.f32.mrb[0].mxu0
    %v962 = vadd.f32 %v865, %v961
    %v963 = vpop.f32.mrb[0].mxu0
    %964 = vmatprep.mubr.bf16.mxu0 %v766
    %965 = vmatmul.mubr.bf16.gmra.mrb[0].mxu0 %v765
    %v966 = vpop.f32.mrb[0].mxu0
    %v967 = vadd.f32 %v870, %v966
    %v968 = vpop.f32.mrb[0].mxu0
    %v969 = vpop.f32.mrb[0].mxu0
    %v970 = vadd.f32 %v873, %v969
    %v971 = vpop.f32.mrb[0].mxu0
    %972 = vmatprep.mubr.bf16.mxu0 %v770
    %973 = vmatmul.mubr.bf16.gmra.mrb[0].mxu0 %v769
    %v974 = vpop.f32.mrb[0].mxu0
    %v975 = vadd.f32 %v878, %v974
    %v976 = vpop.f32.mrb[0].mxu0
    %v977 = vpop.f32.mrb[0].mxu0
    %v978 = vadd.f32 %v881, %v977
    %v979 = vpop.f32.mrb[0].mxu0
    %980 = vmatprep.mubr.bf16.mxu0 %v774
    %981 = vmatmul.mubr.bf16.gmra.mrb[0].mxu0 %v773
    %v982 = vpop.f32.mrb[0].mxu0
    %v983 = vadd.f32 %v886, %v982
    %v984 = vpop.f32.mrb[0].mxu0
    %v985 = vpop.f32.mrb[0].mxu0
    %v986 = vadd.f32 %v889, %v985
    %v987 = vpop.f32.mrb[0].mxu0
    %988 = vmatprep.mubr.bf16.mxu0 %v778
    %989 = vmatmul.mubr.bf16.gmra.mrb[0].mxu0 %v777
    %v990 = vpop.f32.mrb[0].mxu0
    %v991 = vadd.f32 %v894, %v990
    %v992 = vpop.f32.mrb[0].mxu0
    %v993 = vpop.f32.mrb[0].mxu0
    %v994 = vadd.f32 %v897, %v993
    %v995 = vpop.f32.mrb[0].mxu0
    %996 = vmatprep.mubr.bf16.mxu0 %v782
    %997 = vmatmul.mubr.bf16.gmra.mrb[0].mxu0 %v781
    %v998 = vpop.f32.mrb[0].mxu0
    %v999 = vadd.f32 %v902, %v998
    %v1000 = vpop.f32.mrb[0].mxu0
    %v1001 = vpop.f32.mrb[0].mxu0
    %v1002 = vadd.f32 %v905, %v1001
    %v1003 = vpop.f32.mrb[0].mxu0
    %1004 = vmatprep.mubr.bf16.mxu0 %v786
    %1005 = vmatmul.mubr.bf16.gmra.mrb[0].mxu0 %v785
    %v1006 = vpop.f32.mrb[0].mxu0
    %v1007 = vadd.f32 %v910, %v1006
    %v1008 = vpop.f32.mrb[0].mxu0
    %v1009 = vpop.f32.mrb[0].mxu0
    %v1010 = vadd.f32 %v913, %v1009
    %v1011 = vpop.f32.mrb[0].mxu0
    %1012 = vdwg.mxu0
    %v1013 = vadd.f32 %v611, %v951
    %v1014 = vadd.f32 %v612, %v954
    %v1015 = vadd.f32 %v613, %v959
    %v1016 = vadd.f32 %v614, %v962
    %v1017 = vadd.f32 %v615, %v967
    %v1018 = vadd.f32 %v616, %v970
    %v1019 = vadd.f32 %v617, %v975
    %v1020 = vadd.f32 %v618, %v978
    %v1021 = vadd.f32 %v619, %v983
    %v1022 = vadd.f32 %v620, %v986
    %v1023 = vadd.f32 %v621, %v991
    %v1024 = vadd.f32 %v622, %v994
    %v1025 = vadd.f32 %v623, %v999
    %v1026 = vadd.f32 %v624, %v1002
    %v1027 = vadd.f32 %v625, %v1007
    %v1028 = vadd.f32 %v626, %v1010
    %vm1029 = vcmask 15360
    %1030 = vst.msk [vmem:[%s4] sm:$0xff] %vm1029, %v1013
    %1031 = vst.msk [vmem:[%s4 + $0x8] sm:$0xff] %vm1029, %v1014
    %1032 = vst.msk [vmem:[%s4 + $0x10] sm:$0xff] %vm1029, %v1015
    %1033 = vst.msk [vmem:[%s4 + $0x18] sm:$0xff] %vm1029, %v1016
    %1034 = vst.msk [vmem:[%s4 + $0x20] sm:$0xff] %vm1029, %v1017
    %1035 = vst.msk [vmem:[%s4 + $0x28] sm:$0xff] %vm1029, %v1018
    %1036 = vst.msk [vmem:[%s4 + $0x30] sm:$0xff] %vm1029, %v1019
    %1037 = vst.msk [vmem:[%s4 + $0x38] sm:$0xff] %vm1029, %v1020
    %1038 = vst.msk [vmem:[%s4 + $0x40] sm:$0xff] %vm1029, %v1021
    %1039 = vst.msk [vmem:[%s4 + $0x48] sm:$0xff] %vm1029, %v1022
    %1040 = vst.msk [vmem:[%s4 + $0x50] sm:$0xff] %vm1029, %v1023
    %1041 = vst.msk [vmem:[%s4 + $0x58] sm:$0xff] %vm1029, %v1024
    %1042 = vst.msk [vmem:[%s4 + $0x60] sm:$0xff] %vm1029, %v1025
    %1043 = vst.msk [vmem:[%s4 + $0x68] sm:$0xff] %vm1029, %v1026
    %1044 = vst.msk [vmem:[%s4 + $0x70] sm:$0xff] %vm1029, %v1027
    %1045 = vst.msk [vmem:[%s4 + $0x78] sm:$0xff] %vm1029, %v1028
    // Predicated region
    $region26: #{tpu_custom_call.1} parent=1 // pred_check
      _
    $region27: #{tpu_custom_call.1} parent=1 // pred_check_branch
      %1047 = sbr.rel (0) target = $region29
    $region28: #{tpu_custom_call.1} parent=1 // pred_region
      _
    $region29: #{tpu_custom_call.1} parent=1 // pred_fallthru
      _
    // Predicated region
    $region30: #{tpu_custom_call.1} parent=1 // pred_check
      _
    $region31: #{tpu_custom_call.1} parent=1 // pred_check_branch
      %1049 = sbr.rel (0) target = $region33
    $region32: #{tpu_custom_call.1} parent=1 // pred_region
      _
    $region33: #{tpu_custom_call.1} parent=1 // pred_fallthru
      _
    %1050 = vsyncpa [#allocation3], 1

</llo_original>
